<compile_context>
chip_gen: v5e
topology: v5e:2x2
jax: 0.10.0
libtpu: 0.0.40
codegen_flags: <defaults>
</compile_context>

<pallas_src>
import functools

import jax
import jax.numpy as jnp
from jax.experimental import pallas as pl
from jax.experimental.pallas import tpu as pltpu


def _round_up(a, b):
    return (a + b - 1) // b * b


def _cdiv(a, b):
    return (a + b - 1) // b


def _tcn_kernel(xm_ref, xh_ref, wf_ref, bf_ref, wl_ref, bl_ref, o_ref, *,
                c_out, k_size, rt):
    # xm_ref : (C_pad, RT)         bf16  raw input tile (lanes = output positions)
    # xh_ref : (C_pad, 128)        bf16  halo = first 128 columns of the next tile
    # wf_ref : (2*C_out, K*C_pad)  bf16  fused conv1/conv2 weights, cols ordered (k, c)
    # bf_ref : (2*C_out, 1)        f32   fused conv biases
    # wl_ref : (C_out, 1)          f32   Linear weight, applied in f32 on the VPU
    # bl_ref : (1,)                f32   Linear bias (SMEM scalar)
    # o_ref  : (1, RT)             f32   lane-dense output slab
    xw = jnp.concatenate([xm_ref[...], xh_ref[...]], axis=1)      # (C_pad, RT+128)

    # On-chip im2col: K shifted lane slices stacked along the sublane axis.
    # C_pad is a multiple of 16 so the bf16 sublane concat is fully aligned.
    xcol = jnp.concatenate([xw[:, k:k + rt] for k in range(k_size)], axis=0)

    # Single fused MXU matmul for both convolutions (f32 accumulation).
    h = jnp.dot(wf_ref[...], xcol, preferred_element_type=jnp.float32)
    h = h + bf_ref[...]                                            # (2*C_out, RT)

    h1 = h[:c_out, :]                                              # conv_1 output
    h2 = h[c_out:2 * c_out, :]                                     # conv_2 output
    # GLU (h1 * sigmoid(h2)) with the Linear weight kept in f32 (accuracy note).
    g = (h1 * wl_ref[...]) * jax.nn.sigmoid(h2)                    # VPU + EUP
    y = jnp.sum(g, axis=0, keepdims=True)                          # (1, RT) sublane reduce
    o_ref[...] = jnp.maximum(y + bl_ref[0], 0.0)                   # + Linear bias, ReLU


def _vmem_limit_bytes(c_pad, ck_p, m2, c_out, rt):
    dbuf = 2 * (c_pad * rt * 2 + c_pad * 128 * 2)        # double-buffered bf16 input blocks
    obuf = 2 * 8 * rt * 4                                # double-buffered (1, RT) f32 output
    resident = m2 * ck_p * 2 + (m2 + c_out + 8) * 128 * 4
    temps = (c_pad * (rt + 128) * 2                      # xw
             + ck_p * rt * 2                             # im2col operand
             + 4 * m2 * rt * 4)                          # matmul result + GLU temporaries
    est = dbuf + obuf + resident + temps
    return int(min(56 * 2 ** 20, max(24 * 2 ** 20, 2 * est)))


@functools.partial(jax.jit, static_argnames=("row_tile",))
def tcn_forward(x, params, row_tile=4096):
    """x: (B, C_in, L) float -> (B, L_out) float32 (eval-mode forward)."""
    w1, b1, w2, b2, wl, bl = params
    B, C_in, L = x.shape
    C_out, _, K = w1.shape
    L_out = L - K + 1
    assert L_out >= 1, "input_len must be >= kernel_size"
    assert K - 1 <= 128, "halo block supports kernel_size <= 129"

    # --- tiling -----------------------------------------------------------
    C_pad = _round_up(C_in, 16)                       # aligned bf16 sublane packing
    RT = min(_round_up(row_tile, 128), _round_up(L_out, 128))
    if B * _cdiv(L_out, RT) < 2 and L_out > 128:      # keep >=2 grid steps (v7x: 2 TCs)
        RT = _round_up(_cdiv(L_out, 2), 128)
    num_t = _cdiv(L_out, RT)
    Lm = num_t * RT                                   # padded output-position range
    LH = Lm + 128                                     # + one 128-wide halo block
    CKp = K * C_pad
    M2 = 2 * C_out
    rt_b = RT // 128                                  # halo block index stride

    # --- single fused wrapper materialization: pad + bf16 cast -------------
    xp = jnp.pad(x.astype(jnp.float32),
                 ((0, 0), (0, C_pad - C_in), (0, LH - L))).astype(jnp.bfloat16)

    # --- fused conv weights, columns ordered (k, c_in_padded) --------------
    def prep_w(w):
        wt = jnp.transpose(w, (0, 2, 1))                          # (C_out, K, C_in)
        wt = jnp.pad(wt, ((0, 0), (0, 0), (0, C_pad - C_in)))     # (C_out, K, C_pad)
        return wt.reshape(C_out, CKp)

    wf = jnp.concatenate([prep_w(w1), prep_w(w2)], axis=0).astype(jnp.bfloat16)
    bf = jnp.concatenate([b1, b2], axis=0).reshape(M2, 1).astype(jnp.float32)
    wlv = wl.reshape(C_out, 1).astype(jnp.float32)                # nn.Linear weight
    blv = bl.reshape(1).astype(jnp.float32)                       # nn.Linear bias

    cost = pl.CostEstimate(
        flops=2 * M2 * CKp * B * Lm + 6 * C_out * B * Lm,
        transcendentals=C_out * B * Lm,
        bytes_accessed=int(xp.size * 2 + B * num_t * C_pad * 128 * 2
                           + wf.size * 2 + bf.size * 4 + wlv.size * 4 + 4
                           + B * Lm * 4),
    )

    out = pl.pallas_call(
        functools.partial(_tcn_kernel, c_out=C_out, k_size=K, rt=RT),
        out_shape=jax.ShapeDtypeStruct((B, 1, Lm), jnp.float32),
        grid_spec=pltpu.PrefetchScalarGridSpec(
            num_scalar_prefetch=0,
            grid=(B, num_t),
            in_specs=[
                # raw input tile: (C_pad, RT) at output positions [t*RT, (t+1)*RT)
                pl.BlockSpec((None, C_pad, RT), lambda b, t: (b, 0, t)),
                # halo: first 128 columns of the NEXT tile, same padded array
                pl.BlockSpec((None, C_pad, 128), lambda b, t: (b, 0, (t + 1) * rt_b)),
                pl.BlockSpec((M2, CKp), lambda b, t: (0, 0)),      # resident fused weights
                pl.BlockSpec((M2, 1), lambda b, t: (0, 0)),        # fused conv biases
                pl.BlockSpec((C_out, 1), lambda b, t: (0, 0)),     # Linear weight (f32)
                pl.BlockSpec(memory_space=pltpu.MemorySpace.SMEM), # Linear bias scalar
            ],
            out_specs=pl.BlockSpec((None, 1, RT), lambda b, t: (b, 0, t)),
        ),
        compiler_params=pltpu.CompilerParams(
            dimension_semantics=("parallel", "parallel"),
            vmem_limit_bytes=_vmem_limit_bytes(C_pad, CKp, M2, C_out, RT),
        ),
        cost_estimate=cost,
    )(xp, xp, wf, bf, wlv, blv)

    return out[:, 0, :L_out]


def init_params(key, in_channels=12, out_channels=32, kernel_size=7):
    k1, k2, k3, k4, k5, k6 = jax.random.split(key, 6)
    scale = 0.1
    w1 = scale * jax.random.normal(k1, (out_channels, in_channels, kernel_size), jnp.float32)
    b1 = scale * jax.random.normal(k2, (out_channels,), jnp.float32)
    w2 = scale * jax.random.normal(k3, (out_channels, in_channels, kernel_size), jnp.float32)
    b2 = scale * jax.random.normal(k4, (out_channels,), jnp.float32)
    wl = scale * jax.random.normal(k5, (1, out_channels), jnp.float32)   # nn.Linear(out_channels, 1)
    bl = scale * jax.random.normal(k6, (1,), jnp.float32)
    return (w1, b1, w2, b2, wl, bl)


def _reference(x, params):
    """Pure-JAX f32 reference of the PyTorch forward (eval mode)."""
    w1, b1, w2, b2, wl, bl = params
    dn = jax.lax.conv_dimension_numbers(x.shape, w1.shape, ("NCH", "OIH", "NCH"))
    h1 = jax.lax.conv_general_dilated(x, w1, (1,), "VALID", dimension_numbers=dn) + b1[None, :, None]
    h2 = jax.lax.conv_general_dilated(x, w2, (1,), "VALID", dimension_numbers=dn) + b2[None, :, None]
    g = h1 * jax.nn.sigmoid(h2)                                  # GLU over cat dim=1
    y = jnp.einsum("bct,oc->bto", g, wl) + bl                    # permute + Linear
    return jnp.maximum(y, 0.0)[..., 0]                           # ReLU + squeeze


if __name__ == "__main__":
    key = jax.random.PRNGKey(0)
    kp, kx = jax.random.split(key)

    # Module defaults: in_channels=12, out_channels=32, kernel_size=7, input_len=30
    B, C_IN, L = 2, 12, 30
    params = init_params(kp, in_channels=C_IN, out_channels=32, kernel_size=7)
    x = jax.random.normal(kx, (B, C_IN, L), jnp.float32)

    out = tcn_forward(x, params)
    out = jax.block_until_ready(out)

    ref = _reference(x, params)
    assert out.shape == (B, L - 7 + 1)
    # bf16 MXU operands (input + conv weights) with f32 accumulation -> relaxed tolerance.
    assert jnp.allclose(out, ref, atol=2e-2, rtol=2e-2), "mismatch vs reference"

    # TODO(synk): nn.Dropout is treated as identity (inference/eval semantics).
    print("KERNEL_OK")
</pallas_src>

<mosaic_0001>
module attributes {stable_mosaic.version = 11 : i64} {
  func.func @_tcn_kernel(%arg0: i32, %arg1: i32, %arg2: memref<1x16x128xbf16, #tpu.memory_space<vmem>>, %arg3: memref<1x16x128xbf16, #tpu.memory_space<vmem>>, %arg4: memref<64x112xbf16, #tpu.memory_space<vmem>>, %arg5: memref<64x1xf32, #tpu.memory_space<vmem>>, %arg6: memref<32x1xf32, #tpu.memory_space<vmem>>, %arg7: memref<1xf32, #tpu.memory_space<smem>>, %arg8: memref<1x1x128xf32, #tpu.memory_space<vmem>>) attributes {dimension_semantics = [#tpu.dimension_semantics<parallel>, #tpu.dimension_semantics<parallel>], iteration_bounds = array<i64: 2, 1>, scalar_prefetch = 0 : i64, scratch_operands = 0 : i64, tpu.core_type = #tpu.core_type<tc>, window_params = [{transform_indices = @transform_0, window_bounds = array<i64: 1, 16, 128>}, {transform_indices = @transform_1, window_bounds = array<i64: 1, 16, 128>}, {pipeline_mode = #tpu.pipeline_mode<synchronous>, transform_indices = @transform_2, window_bounds = array<i64: 64, 112>}, {pipeline_mode = #tpu.pipeline_mode<synchronous>, transform_indices = @transform_3, window_bounds = array<i64: 64, 1>}, {pipeline_mode = #tpu.pipeline_mode<synchronous>, transform_indices = @transform_4, window_bounds = array<i64: 32, 1>}, {transform_indices = @transform_5, window_bounds = array<i64: 1>}, {transform_indices = @transform_6, window_bounds = array<i64: 1, 1, 128>}]} {
    %c0 = arith.constant 0 : index
    %c0_0 = arith.constant 0 : index
    %c0_1 = arith.constant 0 : index
    %0 = vector.load %arg2[%c0, %c0_0, %c0_1] : memref<1x16x128xbf16, #tpu.memory_space<vmem>>, vector<1x16x128xbf16>
    %1 = vector.shape_cast %0 : vector<1x16x128xbf16> to vector<16x128xbf16>
    %c0_2 = arith.constant 0 : index
    %c0_3 = arith.constant 0 : index
    %c0_4 = arith.constant 0 : index
    %2 = vector.load %arg3[%c0_2, %c0_3, %c0_4] : memref<1x16x128xbf16, #tpu.memory_space<vmem>>, vector<1x16x128xbf16>
    %3 = vector.shape_cast %2 : vector<1x16x128xbf16> to vector<16x128xbf16>
    %4 = tpu.concatenate %1, %3 in 1 : vector<16x128xbf16>, vector<16x128xbf16> -> vector<16x256xbf16>
    %5 = vector.extract_strided_slice %4 {offsets = [0, 0], sizes = [16, 128], strides = [1, 1]} : vector<16x256xbf16> to vector<16x128xbf16>
    %6 = vector.extract_strided_slice %4 {offsets = [0, 1], sizes = [16, 128], strides = [1, 1]} : vector<16x256xbf16> to vector<16x128xbf16>
    %7 = vector.extract_strided_slice %4 {offsets = [0, 2], sizes = [16, 128], strides = [1, 1]} : vector<16x256xbf16> to vector<16x128xbf16>
    %8 = vector.extract_strided_slice %4 {offsets = [0, 3], sizes = [16, 128], strides = [1, 1]} : vector<16x256xbf16> to vector<16x128xbf16>
    %9 = vector.extract_strided_slice %4 {offsets = [0, 4], sizes = [16, 128], strides = [1, 1]} : vector<16x256xbf16> to vector<16x128xbf16>
    %10 = vector.extract_strided_slice %4 {offsets = [0, 5], sizes = [16, 128], strides = [1, 1]} : vector<16x256xbf16> to vector<16x128xbf16>
    %11 = vector.extract_strided_slice %4 {offsets = [0, 6], sizes = [16, 128], strides = [1, 1]} : vector<16x256xbf16> to vector<16x128xbf16>
    %12 = tpu.concatenate %5, %6, %7, %8, %9, %10, %11 in 0 : vector<16x128xbf16>, vector<16x128xbf16>, vector<16x128xbf16>, vector<16x128xbf16>, vector<16x128xbf16>, vector<16x128xbf16>, vector<16x128xbf16> -> vector<112x128xbf16>
    %c0_5 = arith.constant 0 : index
    %c0_6 = arith.constant 0 : index
    %13 = vector.load %arg4[%c0_5, %c0_6] : memref<64x112xbf16, #tpu.memory_space<vmem>>, vector<64x112xbf16>
    %cst = arith.constant dense<0.000000e+00> : vector<64x128xf32>
    %14 = tpu.matmul %13, %12, %cst {dimension_numbers = #tpu.dot_dimension_numbers<[1], [0], [0], [1], [0, 0, 1, 1], [], []>} : vector<64x112xbf16>, vector<112x128xbf16>, vector<64x128xf32> -> vector<64x128xf32>
    %c0_7 = arith.constant 0 : index
    %c0_8 = arith.constant 0 : index
    %15 = vector.load %arg5[%c0_7, %c0_8] : memref<64x1xf32, #tpu.memory_space<vmem>>, vector<64x1xf32>
    %16 = vector.broadcast %15 : vector<64x1xf32> to vector<64x128xf32>
    %17 = arith.addf %14, %16 : vector<64x128xf32>
    %18 = vector.extract_strided_slice %17 {offsets = [0, 0], sizes = [32, 128], strides = [1, 1]} : vector<64x128xf32> to vector<32x128xf32>
    %19 = vector.extract_strided_slice %17 {offsets = [32, 0], sizes = [32, 128], strides = [1, 1]} : vector<64x128xf32> to vector<32x128xf32>
    %c0_9 = arith.constant 0 : index
    %c0_10 = arith.constant 0 : index
    %20 = vector.load %arg6[%c0_9, %c0_10] : memref<32x1xf32, #tpu.memory_space<vmem>>, vector<32x1xf32>
    %21 = vector.broadcast %20 : vector<32x1xf32> to vector<32x128xf32>
    %22 = arith.mulf %18, %21 : vector<32x128xf32>
    %23 = arith.negf %19 : vector<32x128xf32>
    %24 = math.exp %23 : vector<32x128xf32>
    %cst_11 = arith.constant 1.000000e+00 : f32
    %25 = vector.broadcast %cst_11 : f32 to vector<32x128xf32>
    %26 = arith.addf %25, %24 : vector<32x128xf32>
    %27 = arith.divf %25, %26 : vector<32x128xf32>
    %28 = arith.mulf %22, %27 : vector<32x128xf32>
    %cst_12 = arith.constant dense<0.000000e+00> : vector<128xf32>
    %29 = vector.multi_reduction <add>, %28, %cst_12 [0] : vector<32x128xf32> to vector<128xf32>
    %30 = vector.shape_cast %29 : vector<128xf32> to vector<1x128xf32>
    %c0_13 = arith.constant 0 : index
    %31 = memref.load %arg7[%c0_13] : memref<1xf32, #tpu.memory_space<smem>>
    %32 = vector.broadcast %31 : f32 to vector<1x128xf32>
    %33 = arith.addf %30, %32 : vector<1x128xf32>
    %cst_14 = arith.constant 0.000000e+00 : f32
    %34 = vector.broadcast %cst_14 : f32 to vector<1x128xf32>
    %35 = arith.maximumf %33, %34 : vector<1x128xf32>
    %c0_15 = arith.constant 0 : index
    %c0_16 = arith.constant 0 : index
    %c0_17 = arith.constant 0 : index
    %36 = vector.load %arg8[%c0_15, %c0_16, %c0_17] : memref<1x1x128xf32, #tpu.memory_space<vmem>>, vector<1x1x128xf32>
    %37 = vector.shape_cast %36 : vector<1x1x128xf32> to vector<1x128xf32>
    %38 = vector.shape_cast %35 : vector<1x128xf32> to vector<1x1x128xf32>
    tpu.vector_store %arg8[%c0_15, %c0_16, %c0_17], %38 {strides = array<i32>} : memref<1x1x128xf32, #tpu.memory_space<vmem>>, vector<1x1x128xf32>,
    return
  }
  func.func @transform_0(%arg0: i32, %arg1: i32) -> (i32, i32, i32) {
    %c0_i32 = arith.constant 0 : i32
    %c0_i32_0 = arith.constant 0 : i32
    return %arg0, %c0_i32, %arg1 : i32, i32, i32
  }
  func.func @transform_1(%arg0: i32, %arg1: i32) -> (i32, i32, i32) {
    %c1_i32 = arith.constant 1 : i32
    %0 = arith.addi %arg1, %c1_i32 : i32
    %c1_i32_0 = arith.constant 1 : i32
    %1 = arith.muli %0, %c1_i32_0 : i32
    %c0_i32 = arith.constant 0 : i32
    %c0_i32_1 = arith.constant 0 : i32
    return %arg0, %c0_i32, %1 : i32, i32, i32
  }
  func.func @transform_2(%arg0: i32, %arg1: i32) -> (i32, i32) {
    %c0_i32 = arith.constant 0 : i32
    %c0_i32_0 = arith.constant 0 : i32
    %c0_i32_1 = arith.constant 0 : i32
    return %c0_i32, %c0_i32_0 : i32, i32
  }
  func.func @transform_3(%arg0: i32, %arg1: i32) -> (i32, i32) {
    %c0_i32 = arith.constant 0 : i32
    %c0_i32_0 = arith.constant 0 : i32
    %c0_i32_1 = arith.constant 0 : i32
    return %c0_i32, %c0_i32_0 : i32, i32
  }
  func.func @transform_4(%arg0: i32, %arg1: i32) -> (i32, i32) {
    %c0_i32 = arith.constant 0 : i32
    %c0_i32_0 = arith.constant 0 : i32
    %c0_i32_1 = arith.constant 0 : i32
    return %c0_i32, %c0_i32_0 : i32, i32
  }
  func.func @transform_5(%arg0: i32, %arg1: i32) -> i32 {
    %c0_i32 = arith.constant 0 : i32
    %c0_i32_0 = arith.constant 0 : i32
    return %c0_i32 : i32
  }
  func.func @transform_6(%arg0: i32, %arg1: i32) -> (i32, i32, i32) {
    %c0_i32 = arith.constant 0 : i32
    %c0_i32_0 = arith.constant 0 : i32
    return %arg0, %c0_i32, %arg1 : i32, i32, i32
  }
}

</mosaic_0001>

<llo_original>
// kernel: tcn_forward.1
$region0: #{tcn_forward.1}
  #allocation0 [shape = 'u32[]', space=smem, size = 0x4, offset = 0x4, fixed_abs, tag = 'smem constant byte address 0x4 - core index']
  #allocation1 [shape = 'u32[72,128]{1,0:T(1,128)}', space=vmem, size = 0x9000, scoped, tag = 'internal scratch']
  #allocation2 [shape = 'f32[1]{0:T(128)S(6)}', space=smem, size = 0x200, scoped, tag = 'scoped memory for tcn_forward.1']
  %s0 = inlined_call_operand.vmem [shape: bf16[2,16,256], index: 0, kind: input, shape index: {}, may-alias: {0,1}]
  %s1 = inlined_call_operand.vmem [shape: bf16[2,16,256], index: 1, kind: input, shape index: {}, may-alias: {0,1}]
  %s2 = inlined_call_operand.vmem [shape: bf16[64,112], index: 2, kind: input, shape index: {}]
  %s3 = inlined_call_operand.vmem [shape: f32[64,1], index: 3, kind: input, shape index: {}]
  %s4 = inlined_call_operand.vmem [shape: f32[32,1], index: 4, kind: input, shape index: {}]
  %s5 = inlined_call_operand.<no memory space> [shape: f32[1], index: 5, kind: input, shape index: {}]
  %s6 = inlined_call_operand.hbm [shape: f32[2,1,128], index: 6, kind: output, shape index: {}]
  %s7 = sld [smem:[#allocation0]]
  $region139: #{tcn_forward.1} parent=0
    _
  %s9 = ssub.s32 1, %s7
  %s10 = scalar_select 0, %s9, %s7
  %11 = sst [smem:[#allocation2]] %s5
  $region1: #{tcn_forward.1} parent=0
    #allocation3 [shape = 'u8[8192]{0}', space=vmem, size = 0x2000, scoped, tag = 'input window, operand 0']
    #allocation4 [shape = 'u8[8192]{0}', space=vmem, size = 0x2000, scoped, tag = 'input window, operand 1']
    #allocation5 [shape = 'u8[1024]{0}', space=vmem, size = 0x400, scoped, tag = 'output window, operand 0']
    #allocation6 [shape = 's32[2]{0}', space=sflag, size = 0x8, scoped, tag = 'scoped memory for tcn_forward.1']
    %12 = vsyncpa [#allocation6], 0
    %s13 = scalar_lea.sflag [#allocation6], 1
    %14 = vsyncpa %s13, 0
    loop: start=0, step=1, limit=4
    $region2: #{tcn_forward.1} parent=1 // loop_pre_header
      _
    $region3: #{tcn_forward.1} parent=1 // loop_header
      %s16 = sphi 0, %s20
      %p17 = scmp.ge.s32.totalorder %s16, 4
      %s23 = sphi 0, %s35
      %s24 = sphi 0, %s31
      %s25 = sphi 0, %s23
      %s26 = sphi 0, %s24
      %s27 = sphi 0, %s25
      %s28 = sphi 0, %s26
      %s40 = sphi 0, %s42
      %s43 = sphi 0, %s40
      %s44 = sphi 0, %s43
      %s60 = sphi 0, %s44
      %s70 = sphi 0, %s72
      %s73 = sphi 0, %s70
      %s74 = sphi 0, %s73
      %s90 = sphi 0, %s74
      %s94 = sphi 0, %s94
      %s96 = sphi 0, %s94
      %s97 = sphi 0, %s96
      %s111 = sphi 0, %s97
      %s115 = sphi 0, %s115
      %s117 = sphi 0, %s115
      %s118 = sphi 0, %s117
      %s132 = sphi 0, %s118
      %s136 = sphi 0, %s136
      %s138 = sphi 0, %s136
      %s139 = sphi 0, %s138
      %s153 = sphi 0, %s139
      %s157 = sphi 0, %s157
      %s159 = sphi 0, %s157
      %s160 = sphi 0, %s159
      %s174 = sphi 0, %s160
      %s182 = sphi 0, %s184
      %s185 = sphi 0, %s182
      %s186 = sphi 0, %s185
      %s202 = sphi 0, %s186
    $region4: #{tcn_forward.1} parent=1 // loop_header_branch
      %19 = sbr.rel (%p17) target = $region8
    $region5: #{tcn_forward.1} parent=1 // loop_body
      %s21 = ssub.s32 %s16, 1
      %s22 = ssub.s32 %s16, 2
      %s29 = sadd.s32 1, %s24
      %p30 = scmp.ge.s32.totalorder %s29, 1
      %s31 = scalar_select %p30, 0, %s29
      %s32 = sadd.s32 1, %s23
      %s33 = scalar_select %p30, %s32, %s23
      %p34 = scmp.ge.s32.totalorder %s33, 2
      %s35 = scalar_select %p34, 0, %s33
      %s36 = ssub.s32 %s23, %s35
      %s37 = ssub.s32 %s24, %s31
      %s38 = sor.u32 %s36, %s37
      %p39 = scmp.eq.s32.totalorder %s38, 0
      %s41 = sadd.s32 %s40, 1
      %s42 = scalar_select %p39, %s40, %s41
      %p45 = pneg %p39
      %p46 = scmp.eq.s32.totalorder %s16, 1
      %p47 = por %p45, %p46
      %p48 = scmp.ne.s32.totalorder %s40, %s43
      %p49 = scmp.eq.s32.totalorder %s16, 0
      %p50 = por %p48, %p49
      %p51 = scmp.ne.s32.totalorder %s40, %s43
      %p52 = scmp.eq.s32.totalorder %s21, 1
      %p53 = por %p51, %p52
      %p54 = scmp.ne.s32.totalorder %s43, %s44
      %p55 = scmp.eq.s32.totalorder %s21, 0
      %p56 = por %p54, %p55
      %p57 = scmp.ne.s32.totalorder %s43, %s44
      %p58 = scmp.eq.s32.totalorder %s22, 1
      %p59 = por %p57, %p58
      %p61 = scmp.ne.s32.totalorder %s44, %s60
      %p62 = scmp.eq.s32.totalorder %s22, 0
      %p63 = por %p61, %p62
      %s64 = sadd.s32 %s24, 1
      %s65 = sadd.s32 %s31, 1
      %s66 = ssub.s32 %s23, %s35
      %s67 = ssub.s32 %s64, %s65
      %s68 = sor.u32 %s66, %s67
      %p69 = scmp.eq.s32.totalorder %s68, 0
      %s71 = sadd.s32 %s70, 1
      %s72 = scalar_select %p69, %s70, %s71
      %p75 = pneg %p69
      %p76 = scmp.eq.s32.totalorder %s16, 1
      %p77 = por %p75, %p76
      %p78 = scmp.ne.s32.totalorder %s70, %s73
      %p79 = scmp.eq.s32.totalorder %s16, 0
      %p80 = por %p78, %p79
      %p81 = scmp.ne.s32.totalorder %s70, %s73
      %p82 = scmp.eq.s32.totalorder %s21, 1
      %p83 = por %p81, %p82
      %p84 = scmp.ne.s32.totalorder %s73, %s74
      %p85 = scmp.eq.s32.totalorder %s21, 0
      %p86 = por %p84, %p85
      %p87 = scmp.ne.s32.totalorder %s73, %s74
      %p88 = scmp.eq.s32.totalorder %s22, 1
      %p89 = por %p87, %p88
      %p91 = scmp.ne.s32.totalorder %s74, %s90
      %p92 = scmp.eq.s32.totalorder %s22, 0
      %p93 = por %p91, %p92
      %s95 = sadd.s32 %s94, 1
      %p98 = scmp.eq.s32.totalorder %s16, 1
      %p99 = scmp.ne.s32.totalorder %s94, %s96
      %p100 = scmp.eq.s32.totalorder %s16, 0
      %p101 = por %p99, %p100
      %p102 = scmp.ne.s32.totalorder %s94, %s96
      %p103 = scmp.eq.s32.totalorder %s21, 1
      %p104 = por %p102, %p103
      %p105 = scmp.ne.s32.totalorder %s96, %s97
      %p106 = scmp.eq.s32.totalorder %s21, 0
      %p107 = por %p105, %p106
      %p108 = scmp.ne.s32.totalorder %s96, %s97
      %p109 = scmp.eq.s32.totalorder %s22, 1
      %p110 = por %p108, %p109
      %p112 = scmp.ne.s32.totalorder %s97, %s111
      %p113 = scmp.eq.s32.totalorder %s22, 0
      %p114 = por %p112, %p113
      %s116 = sadd.s32 %s115, 1
      %p119 = scmp.eq.s32.totalorder %s16, 1
      %p120 = scmp.ne.s32.totalorder %s115, %s117
      %p121 = scmp.eq.s32.totalorder %s16, 0
      %p122 = por %p120, %p121
      %p123 = scmp.ne.s32.totalorder %s115, %s117
      %p124 = scmp.eq.s32.totalorder %s21, 1
      %p125 = por %p123, %p124
      %p126 = scmp.ne.s32.totalorder %s117, %s118
      %p127 = scmp.eq.s32.totalorder %s21, 0
      %p128 = por %p126, %p127
      %p129 = scmp.ne.s32.totalorder %s117, %s118
      %p130 = scmp.eq.s32.totalorder %s22, 1
      %p131 = por %p129, %p130
      %p133 = scmp.ne.s32.totalorder %s118, %s132
      %p134 = scmp.eq.s32.totalorder %s22, 0
      %p135 = por %p133, %p134
      %s137 = sadd.s32 %s136, 1
      %p140 = scmp.eq.s32.totalorder %s16, 1
      %p141 = scmp.ne.s32.totalorder %s136, %s138
      %p142 = scmp.eq.s32.totalorder %s16, 0
      %p143 = por %p141, %p142
      %p144 = scmp.ne.s32.totalorder %s136, %s138
      %p145 = scmp.eq.s32.totalorder %s21, 1
      %p146 = por %p144, %p145
      %p147 = scmp.ne.s32.totalorder %s138, %s139
      %p148 = scmp.eq.s32.totalorder %s21, 0
      %p149 = por %p147, %p148
      %p150 = scmp.ne.s32.totalorder %s138, %s139
      %p151 = scmp.eq.s32.totalorder %s22, 1
      %p152 = por %p150, %p151
      %p154 = scmp.ne.s32.totalorder %s139, %s153
      %p155 = scmp.eq.s32.totalorder %s22, 0
      %p156 = por %p154, %p155
      %s158 = sadd.s32 %s157, 1
      %p161 = scmp.eq.s32.totalorder %s16, 1
      %p162 = scmp.ne.s32.totalorder %s157, %s159
      %p163 = scmp.eq.s32.totalorder %s16, 0
      %p164 = por %p162, %p163
      %p165 = scmp.ne.s32.totalorder %s157, %s159
      %p166 = scmp.eq.s32.totalorder %s21, 1
      %p167 = por %p165, %p166
      %p168 = scmp.ne.s32.totalorder %s159, %s160
      %p169 = scmp.eq.s32.totalorder %s21, 0
      %p170 = por %p168, %p169
      %p171 = scmp.ne.s32.totalorder %s159, %s160
      %p172 = scmp.eq.s32.totalorder %s22, 1
      %p173 = por %p171, %p172
      %p175 = scmp.ne.s32.totalorder %s160, %s174
      %p176 = scmp.eq.s32.totalorder %s22, 0
      %p177 = por %p175, %p176
      %s178 = ssub.s32 %s23, %s35
      %s179 = ssub.s32 %s24, %s31
      %s180 = sor.u32 %s178, %s179
      %p181 = scmp.eq.s32.totalorder %s180, 0
      %s183 = sadd.s32 %s182, 1
      %s184 = scalar_select %p181, %s182, %s183
      %p187 = pneg %p181
      %p188 = scmp.eq.s32.totalorder %s16, 1
      %p189 = por %p187, %p188
      %p190 = scmp.ne.s32.totalorder %s182, %s185
      %p191 = scmp.eq.s32.totalorder %s16, 0
      %p192 = por %p190, %p191
      %p193 = scmp.ne.s32.totalorder %s182, %s185
      %p194 = scmp.eq.s32.totalorder %s21, 1
      %p195 = por %p193, %p194
      %p196 = scmp.ne.s32.totalorder %s185, %s186
      %p197 = scmp.eq.s32.totalorder %s21, 0
      %p198 = por %p196, %p197
      %p199 = scmp.ne.s32.totalorder %s185, %s186
      %p200 = scmp.eq.s32.totalorder %s22, 1
      %p201 = por %p199, %p200
      %p203 = scmp.ne.s32.totalorder %s186, %s202
      %p204 = scmp.eq.s32.totalorder %s22, 0
      %p205 = por %p203, %p204
      %p206 = scmp.le.s32.totalorder 1, %s16
      %p207 = scmp.lt.s32.totalorder %s16, 3
      %p208 = pnand %p206, %p207
      %p209 = pneg %p208
      // Predicated region
      $region9: #{tcn_forward.1} parent=5 // pred_check
        _
      $region10: #{tcn_forward.1} parent=5 // pred_check_branch
        %211 = sbr.rel (%p208) target = $region12
      $region11: #{tcn_forward.1} parent=5 // pred_region
        %s212 = ssub.s32 %s16, 1
        // Predicated region
        $region13: #{tcn_forward.1} parent=11 // pred_check
          %p213 = pneg %p107
        $region14: #{tcn_forward.1} parent=11 // pred_check_branch
          %215 = sbr.rel (%p213) target = $region16
        $region15: #{tcn_forward.1} parent=11 // pred_region
          _
        $region16: #{tcn_forward.1} parent=11 // pred_fallthru
          _
        // Predicated region
        $region17: #{tcn_forward.1} parent=11 // pred_check
          %p216 = pneg %p128
        $region18: #{tcn_forward.1} parent=11 // pred_check_branch
          %218 = sbr.rel (%p216) target = $region20
        $region19: #{tcn_forward.1} parent=11 // pred_region
          _
        $region20: #{tcn_forward.1} parent=11 // pred_fallthru
          _
        // Predicated region
        $region21: #{tcn_forward.1} parent=11 // pred_check
          %p219 = pneg %p149
        $region22: #{tcn_forward.1} parent=11 // pred_check_branch
          %221 = sbr.rel (%p219) target = $region24
        $region23: #{tcn_forward.1} parent=11 // pred_region
          _
        $region24: #{tcn_forward.1} parent=11 // pred_fallthru
          _
        // Predicated region
        $region25: #{tcn_forward.1} parent=11 // pred_check
          %p222 = pneg %p170
        $region26: #{tcn_forward.1} parent=11 // pred_check_branch
          %224 = sbr.rel (%p222) target = $region28
        $region27: #{tcn_forward.1} parent=11 // pred_region
          _
        $region28: #{tcn_forward.1} parent=11 // pred_fallthru
          _
      $region12: #{tcn_forward.1} parent=5 // pred_fallthru
        _
      %p225 = scmp.lt.s32.totalorder %s16, 2
      // Predicated region
      $region29: #{tcn_forward.1} parent=5 // pred_check
        %p226 = pneg %p225
      $region30: #{tcn_forward.1} parent=5 // pred_check_branch
        %228 = sbr.rel (%p226) target = $region32
      $region31: #{tcn_forward.1} parent=5 // pred_region
        // Predicated region
        $region33: #{tcn_forward.1} parent=31 // pred_check
          %p229 = pneg %p50
        $region34: #{tcn_forward.1} parent=31 // pred_check_branch
          %231 = sbr.rel (%p229) target = $region36
        $region35: #{tcn_forward.1} parent=31 // pred_region
          %s232 = sand.u32 %s40, 1
          %s233 = sand.u32 %s40, 1
          %s234 = smul.addr %s233, 8
          %s235 = scalar_lea.vmem [#allocation3], %s234
          %s236 = smul.addr %s23, 4
          %s237 = sadd.s32 %s24, %s236
          %s238 = smul.addr %s237, 4
          %s239 = scalar_lea.vmem %s0, %s238
          // Predicated region
          $region37: #{tcn_forward.1} parent=35 // pred_check
            _
          $region38: #{tcn_forward.1} parent=35 // pred_check_branch
            %241 = sbr.rel (0) target = $region40
          $region39: #{tcn_forward.1} parent=35 // pred_region
            // Predicated region
            $region41: #{tcn_forward.1} parent=39 // pred_check
              _
            $region42: #{tcn_forward.1} parent=39 // pred_check_branch
              %243 = sbr.rel target = $region44
            $region43: #{tcn_forward.1} parent=39 // pred_region
              // Predicated region
              $region56: #{tcn_forward.1} parent=43 // pred_check
                _
              $region57: #{tcn_forward.1} parent=43 // pred_check_branch
                %261 = sbr.rel (0) target = $region59
              $region58: #{tcn_forward.1} parent=43 // pred_region
                loop: start=0, step=1, limit=1
                $region60: #{tcn_forward.1} parent=58 // loop_pre_header
                  _
                $region61: #{tcn_forward.1} parent=58 // loop_header
                  %s263 = sphi 0, %s267
                  %p264 = scmp.ge.s32.totalorder %s263, 1
                  %s268 = sphi %s239, %s239
                  %s269 = sphi %s235, %s235
                $region62: #{tcn_forward.1} parent=58 // loop_header_branch
                  %266 = sbr.rel (%p264) target = $region66
                $region63: #{tcn_forward.1} parent=58 // loop_body
                  _
                $region64: #{tcn_forward.1} parent=58 // loop_footer
                  %s267 = sadd.s32 1, %s263
                $region65: #{tcn_forward.1} parent=58 // loop_footer_branch
                  %262 = sbr.rel target = $region61
                $region66: #{tcn_forward.1} parent=58 // loop_exit
                  _
                %s271 = ssub.s32 16, 1
                loop: start=0, step=1, limit=1
                $region67: #{tcn_forward.1} parent=58 // loop_pre_header
                  _
                $region68: #{tcn_forward.1} parent=58 // loop_header
                  %s273 = sphi 0, %s277
                  %p274 = scmp.ge.s32.totalorder %s273, 1
                  %s278 = sphi %s239, %s239
                  %s279 = sphi %s235, %s235
                $region69: #{tcn_forward.1} parent=58 // loop_header_branch
                  %276 = sbr.rel (%p274) target = $region73
                $region70: #{tcn_forward.1} parent=58 // loop_body
                  %v280 = vld [vmem:[%s278] sm:%s271]
                  %281 = vst [vmem:[%s279] sm:%s271] %v280
                  %v282 = vld [vmem:[%s278 + $0x8] sm:%s271]
                  %283 = vst [vmem:[%s279 + $0x4] sm:%s271] %v282
                $region71: #{tcn_forward.1} parent=58 // loop_footer
                  %s277 = sadd.s32 1, %s273
                $region72: #{tcn_forward.1} parent=58 // loop_footer_branch
                  %272 = sbr.rel target = $region68
                $region73: #{tcn_forward.1} parent=58 // loop_exit
                  _
              $region59: #{tcn_forward.1} parent=43 // pred_fallthru
                _
            $region44: #{tcn_forward.1} parent=39 // pred_fallthru
              _
            // Predicated region
            $region45: #{tcn_forward.1} parent=39 // pred_check
              _
            $region46: #{tcn_forward.1} parent=39 // pred_check_branch
              %245 = sbr.rel (0) target = $region48
            $region47: #{tcn_forward.1} parent=39 // pred_region
              %s247 = ssub.s32 16, 1
              loop: start=0, step=1, limit=1
              $region49: #{tcn_forward.1} parent=47 // loop_pre_header
                _
              $region50: #{tcn_forward.1} parent=47 // loop_header
                %s249 = sphi 0, %s253
                %p250 = scmp.ge.s32.totalorder %s249, 1
                %s254 = sphi %s239, %s239
                %s255 = sphi %s235, %s235
              $region51: #{tcn_forward.1} parent=47 // loop_header_branch
                %252 = sbr.rel (%p250) target = $region55
              $region52: #{tcn_forward.1} parent=47 // loop_body
                %v256 = vld [vmem:[%s254] sm:%s247]
                %257 = vst [vmem:[%s255] sm:%s247] %v256
                %v258 = vld [vmem:[%s254 + $0x8] sm:%s247]
                %259 = vst [vmem:[%s255 + $0x4] sm:%s247] %v258
              $region53: #{tcn_forward.1} parent=47 // loop_footer
                %s253 = sadd.s32 1, %s249
              $region54: #{tcn_forward.1} parent=47 // loop_footer_branch
                %248 = sbr.rel target = $region50
              $region55: #{tcn_forward.1} parent=47 // loop_exit
                _
            $region48: #{tcn_forward.1} parent=39 // pred_fallthru
              _
          $region40: #{tcn_forward.1} parent=35 // pred_fallthru
            _
          %284 = vnop
        $region36: #{tcn_forward.1} parent=31 // pred_fallthru
          _
        // Predicated region
        $region74: #{tcn_forward.1} parent=31 // pred_check
          %p285 = pneg %p80
        $region75: #{tcn_forward.1} parent=31 // pred_check_branch
          %287 = sbr.rel (%p285) target = $region77
        $region76: #{tcn_forward.1} parent=31 // pred_region
          %s288 = sand.u32 %s70, 1
          %s289 = sand.u32 %s70, 1
          %s290 = smul.addr %s289, 8
          %s291 = scalar_lea.vmem [#allocation4], %s290
          %s292 = sadd.s32 %s24, 1
          %s293 = smul.addr %s23, 4
          %s294 = sadd.s32 %s292, %s293
          %s295 = smul.addr %s294, 4
          %s296 = scalar_lea.vmem %s1, %s295
          // Predicated region
          $region78: #{tcn_forward.1} parent=76 // pred_check
            _
          $region79: #{tcn_forward.1} parent=76 // pred_check_branch
            %298 = sbr.rel (0) target = $region81
          $region80: #{tcn_forward.1} parent=76 // pred_region
            // Predicated region
            $region82: #{tcn_forward.1} parent=80 // pred_check
              _
            $region83: #{tcn_forward.1} parent=80 // pred_check_branch
              %300 = sbr.rel target = $region85
            $region84: #{tcn_forward.1} parent=80 // pred_region
              // Predicated region
              $region97: #{tcn_forward.1} parent=84 // pred_check
                _
              $region98: #{tcn_forward.1} parent=84 // pred_check_branch
                %318 = sbr.rel (0) target = $region100
              $region99: #{tcn_forward.1} parent=84 // pred_region
                loop: start=0, step=1, limit=1
                $region101: #{tcn_forward.1} parent=99 // loop_pre_header
                  _
                $region102: #{tcn_forward.1} parent=99 // loop_header
                  %s320 = sphi 0, %s324
                  %p321 = scmp.ge.s32.totalorder %s320, 1
                  %s325 = sphi %s296, %s296
                  %s326 = sphi %s291, %s291
                $region103: #{tcn_forward.1} parent=99 // loop_header_branch
                  %323 = sbr.rel (%p321) target = $region107
                $region104: #{tcn_forward.1} parent=99 // loop_body
                  _
                $region105: #{tcn_forward.1} parent=99 // loop_footer
                  %s324 = sadd.s32 1, %s320
                $region106: #{tcn_forward.1} parent=99 // loop_footer_branch
                  %319 = sbr.rel target = $region102
                $region107: #{tcn_forward.1} parent=99 // loop_exit
                  _
                %s328 = ssub.s32 16, 1
                loop: start=0, step=1, limit=1
                $region108: #{tcn_forward.1} parent=99 // loop_pre_header
                  _
                $region109: #{tcn_forward.1} parent=99 // loop_header
                  %s330 = sphi 0, %s334
                  %p331 = scmp.ge.s32.totalorder %s330, 1
                  %s335 = sphi %s296, %s296
                  %s336 = sphi %s291, %s291
                $region110: #{tcn_forward.1} parent=99 // loop_header_branch
                  %333 = sbr.rel (%p331) target = $region114
                $region111: #{tcn_forward.1} parent=99 // loop_body
                  %v337 = vld [vmem:[%s335] sm:%s328]
                  %338 = vst [vmem:[%s336] sm:%s328] %v337
                  %v339 = vld [vmem:[%s335 + $0x8] sm:%s328]
                  %340 = vst [vmem:[%s336 + $0x4] sm:%s328] %v339
                $region112: #{tcn_forward.1} parent=99 // loop_footer
                  %s334 = sadd.s32 1, %s330
                $region113: #{tcn_forward.1} parent=99 // loop_footer_branch
                  %329 = sbr.rel target = $region109
                $region114: #{tcn_forward.1} parent=99 // loop_exit
                  _
              $region100: #{tcn_forward.1} parent=84 // pred_fallthru
                _
            $region85: #{tcn_forward.1} parent=80 // pred_fallthru
              _
            // Predicated region
            $region86: #{tcn_forward.1} parent=80 // pred_check
              _
            $region87: #{tcn_forward.1} parent=80 // pred_check_branch
              %302 = sbr.rel (0) target = $region89
            $region88: #{tcn_forward.1} parent=80 // pred_region
              %s304 = ssub.s32 16, 1
              loop: start=0, step=1, limit=1
              $region90: #{tcn_forward.1} parent=88 // loop_pre_header
                _
              $region91: #{tcn_forward.1} parent=88 // loop_header
                %s306 = sphi 0, %s310
                %p307 = scmp.ge.s32.totalorder %s306, 1
                %s311 = sphi %s296, %s296
                %s312 = sphi %s291, %s291
              $region92: #{tcn_forward.1} parent=88 // loop_header_branch
                %309 = sbr.rel (%p307) target = $region96
              $region93: #{tcn_forward.1} parent=88 // loop_body
                %v313 = vld [vmem:[%s311] sm:%s304]
                %314 = vst [vmem:[%s312] sm:%s304] %v313
                %v315 = vld [vmem:[%s311 + $0x8] sm:%s304]
                %316 = vst [vmem:[%s312 + $0x4] sm:%s304] %v315
              $region94: #{tcn_forward.1} parent=88 // loop_footer
                %s310 = sadd.s32 1, %s306
              $region95: #{tcn_forward.1} parent=88 // loop_footer_branch
                %305 = sbr.rel target = $region91
              $region96: #{tcn_forward.1} parent=88 // loop_exit
                _
            $region89: #{tcn_forward.1} parent=80 // pred_fallthru
              _
          $region81: #{tcn_forward.1} parent=76 // pred_fallthru
            _
          %341 = vnop
        $region77: #{tcn_forward.1} parent=31 // pred_fallthru
          _
      $region32: #{tcn_forward.1} parent=5 // pred_fallthru
        _
      %p342 = scmp.le.s32.totalorder 1, %s16
      %p343 = scmp.lt.s32.totalorder %s16, 3
      %p344 = pnand %p342, %p343
      %p345 = pneg %p344
      // Predicated region
      $region115: #{tcn_forward.1} parent=5 // pred_check
        _
      $region116: #{tcn_forward.1} parent=5 // pred_check_branch
        %347 = sbr.rel (%p344) target = $region118
      $region117: #{tcn_forward.1} parent=5 // pred_region
        %s348 = ssub.s32 %s16, 1
        %s349 = sand.u32 %s43, 1
        %s350 = sand.u32 %s43, 1
        %s351 = smul.addr %s350, 8
        %s352 = scalar_lea.vmem [#allocation3], %s351
        // Predicated region
        $region119: #{tcn_forward.1} parent=117 // pred_check
          %p353 = pneg %p56
        $region120: #{tcn_forward.1} parent=117 // pred_check_branch
          %355 = sbr.rel (%p353) target = $region122
        $region121: #{tcn_forward.1} parent=117 // pred_region
          _
        $region122: #{tcn_forward.1} parent=117 // pred_fallthru
          _
        %s356 = sand.u32 %s73, 1
        %s357 = sand.u32 %s73, 1
        %s358 = smul.addr %s357, 8
        %s359 = scalar_lea.vmem [#allocation4], %s358
        // Predicated region
        $region123: #{tcn_forward.1} parent=117 // pred_check
          %p360 = pneg %p86
        $region124: #{tcn_forward.1} parent=117 // pred_check_branch
          %362 = sbr.rel (%p360) target = $region126
        $region125: #{tcn_forward.1} parent=117 // pred_region
          _
        $region126: #{tcn_forward.1} parent=117 // pred_fallthru
          _
        %s363 = sand.u32 %s43, 1
        %s364 = sand.u32 %s43, 1
        %s365 = smul.addr %s364, 8
        %s366 = scalar_lea.vmem [#allocation3], %s365
        %p367 = pneg %p56
        %p368 = pneg %p53
        %s369 = sand.u32 %s73, 1
        %s370 = sand.u32 %s73, 1
        %s371 = smul.addr %s370, 8
        %s372 = scalar_lea.vmem [#allocation4], %s371
        %p373 = pneg %p86
        %p374 = pneg %p83
        %p375 = pneg %p107
        %p376 = pneg %p104
        %p377 = pneg %p128
        %p378 = pneg %p125
        %p379 = pneg %p149
        %p380 = pneg %p146
        %p381 = pneg %p170
        %p382 = pneg %p167
        %p383 = pneg %p198
        %p384 = pneg %p195
        %s385 = sand.u32 %s185, 1
        %s386 = scalar_lea.sflag [#allocation6], %s385
        %s387 = sand.u32 %s185, 1
        %s388 = scalar_lea.vmem [#allocation5], %s387
        %s389 = sadd.s32 %s26, 1
        %v391 = vld [vmem:[%s352] sm:$0xf]
        %v392 = vld [vmem:[%s352 + $0x4] sm:$0xf]
        %v393 = vld [vmem:[%s359] sm:$0xf]
        %v394 = vld [vmem:[%s359 + $0x4] sm:$0xf]
        %v397 = vunpack.c.l.b16 %v391
        %v398 = vunpack.c.l.b16 %v392
        %v399 = vpack.c.b16 %v398, %v397
        %v403 = vunpack.c.l.b16 %v393
        %v404 = vunpack.c.l.b16 %v394
        %v405 = vpack.c.b16 %v404, %v403
        %406 = vrot.lane.b32.xlu0 %v399, 127
        %v407 = vpop.permute.xlu0 %406
        %408 = vrot.lane.b32.xlu0 %v405, 127
        %v409 = vpop.permute.xlu0 %408
        %vm410 = vcmask 1039360
        %v411 = vsel %vm410, %v407, %v409
        %413 = vrot.lane.b32.xlu0 %v399, 126
        %v414 = vpop.permute.xlu0 %413
        %415 = vrot.lane.b32.xlu0 %v405, 126
        %v416 = vpop.permute.xlu0 %415
        %vm417 = vcmask 1031168
        %v418 = vsel %vm417, %v414, %v416
        %420 = vrot.lane.b32.xlu0 %v399, 125
        %v421 = vpop.permute.xlu0 %420
        %422 = vrot.lane.b32.xlu0 %v405, 125
        %v423 = vpop.permute.xlu0 %422
        %vm424 = vcmask 1022976
        %v425 = vsel %vm424, %v421, %v423
        %427 = vrot.lane.b32.xlu0 %v399, 124
        %v428 = vpop.permute.xlu0 %427
        %429 = vrot.lane.b32.xlu0 %v405, 124
        %v430 = vpop.permute.xlu0 %429
        %vm431 = vcmask 1014784
        %v432 = vsel %vm431, %v428, %v430
        %434 = vrot.lane.b32.xlu0 %v399, 123
        %v435 = vpop.permute.xlu0 %434
        %436 = vrot.lane.b32.xlu0 %v405, 123
        %v437 = vpop.permute.xlu0 %436
        %vm438 = vcmask 1006592
        %v439 = vsel %vm438, %v435, %v437
        %441 = vrot.lane.b32.xlu0 %v399, 122
        %v442 = vpop.permute.xlu0 %441
        %443 = vrot.lane.b32.xlu0 %v405, 122
        %v444 = vpop.permute.xlu0 %443
        %vm445 = vcmask 998400
        %v446 = vsel %vm445, %v442, %v444
        %v448 = vld [vmem:[%s2] sm:$0xf]
        %v449 = vld [vmem:[%s2 + $0x4] sm:$0xf]
        %v450 = vld [vmem:[%s2 + $0x8] sm:$0xf]
        %v451 = vld [vmem:[%s2 + $0xc] sm:$0xf]
        %v452 = vld [vmem:[%s2 + $0x10] sm:$0xf]
        %v453 = vld [vmem:[%s2 + $0x14] sm:$0xf]
        %v454 = vld [vmem:[%s2 + $0x18] sm:$0xf]
        %v455 = vld [vmem:[%s2 + $0x1c] sm:$0xf]
        %v456 = vld [vmem:[%s3] sm:$0xff]
        %v457 = vld [vmem:[%s3 + $0x8] sm:$0xff]
        %v458 = vld [vmem:[%s3 + $0x10] sm:$0xff]
        %v459 = vld [vmem:[%s3 + $0x18] sm:$0xff]
        %v460 = vld [vmem:[%s3 + $0x20] sm:$0xff]
        %v461 = vld [vmem:[%s3 + $0x28] sm:$0xff]
        %v462 = vld [vmem:[%s3 + $0x30] sm:$0xff]
        %v463 = vld [vmem:[%s3 + $0x38] sm:$0xff]
        %465 = vset.pattern.permute.xlu0 0
        %466 = vperm.xlu0 %465, %v456
        %v467 = vpop.permute.xlu0 %466
        %470 = vset.pattern.permute.xlu0 0
        %471 = vperm.xlu0 %470, %v457
        %v472 = vpop.permute.xlu0 %471
        %475 = vset.pattern.permute.xlu0 0
        %476 = vperm.xlu0 %475, %v458
        %v477 = vpop.permute.xlu0 %476
        %480 = vset.pattern.permute.xlu0 0
        %481 = vperm.xlu0 %480, %v459
        %v482 = vpop.permute.xlu0 %481
        %485 = vset.pattern.permute.xlu0 0
        %486 = vperm.xlu0 %485, %v460
        %v487 = vpop.permute.xlu0 %486
        %490 = vset.pattern.permute.xlu0 0
        %491 = vperm.xlu0 %490, %v461
        %v492 = vpop.permute.xlu0 %491
        %495 = vset.pattern.permute.xlu0 0
        %496 = vperm.xlu0 %495, %v462
        %v497 = vpop.permute.xlu0 %496
        %500 = vset.pattern.permute.xlu0 0
        %501 = vperm.xlu0 %500, %v463
        %v502 = vpop.permute.xlu0 %501
        %v512 = vunpack.c.l.b16 %v448
        %v513 = vunpack.c.l.b16 %v449
        %v514 = vunpack.c.l.b16 %v450
        %v515 = vunpack.c.l.b16 %v451
        %v516 = vunpack.c.l.b16 %v452
        %v517 = vunpack.c.l.b16 %v453
        %v518 = vunpack.c.l.b16 %v454
        %v519 = vunpack.c.l.b16 %v455
        %v520 = vpack.c.b16 %v513, %v512
        %v521 = vpack.c.b16 %v515, %v514
        %v522 = vpack.c.b16 %v517, %v516
        %v523 = vpack.c.b16 %v519, %v518
        %vm524 = vcmask 916480
        %v526 = vsel %vm524, %v520, 0
        %v529 = vsel %vm524, %v521, 0
        %v532 = vsel %vm524, %v522, 0
        %v535 = vsel %vm524, %v523, 0
        %537 = vmatpush.bf16.msra.mxu0 0
        %538 = vmatpush.bf16.msra.mxu0 %v446
        %539 = vmatpush.bf16.msra.mxu0 %v439
        %540 = vmatpush.bf16.msra.mxu0 %v432
        %541 = vmatpush.bf16.msra.mxu0 %v425
        %542 = vmatpush.bf16.msra.mxu0 %v418
        %543 = vmatpush.bf16.msra.mxu0 %v411
        %544 = vmatpush.bf16.msra.mxu0 %v399
        %545 = vmatmul.bf16.gmra.mxu0 %v526
        %v546 = vpop.f32.mrf.mxu0
        %v547 = vadd.f32 %v467, %v546
        %v548 = vpop.f32.mrf.mxu0
        %v549 = vadd.f32 %v472, %v548
        %550 = vmatmul.bf16.gmra.mxu0 %v529
        %v551 = vpop.f32.mrf.mxu0
        %v552 = vadd.f32 %v477, %v551
        %v553 = vpop.f32.mrf.mxu0
        %v554 = vadd.f32 %v482, %v553
        %555 = vmatmul.bf16.gmra.mxu0 %v532
        %v556 = vpop.f32.mrf.mxu0
        %v557 = vadd.f32 %v487, %v556
        %v558 = vpop.f32.mrf.mxu0
        %v559 = vadd.f32 %v492, %v558
        %560 = vmatmul.bf16.gmra.mxu0 %v535
        %v561 = vpop.f32.mrf.mxu0
        %v562 = vadd.f32 %v497, %v561
        %v563 = vpop.f32.mrf.mxu0
        %v564 = vadd.f32 %v502, %v563
        %565 = vdwg.mxu0
        %v566 = vld [vmem:[%s4] sm:$0xff]
        %v567 = vld [vmem:[%s4 + $0x8] sm:$0xff]
        %v568 = vld [vmem:[%s4 + $0x10] sm:$0xff]
        %v569 = vld [vmem:[%s4 + $0x18] sm:$0xff]
        %571 = vset.pattern.permute.xlu0 0
        %572 = vperm.xlu0 %571, %v566
        %v573 = vpop.permute.xlu0 %572
        %576 = vset.pattern.permute.xlu0 0
        %577 = vperm.xlu0 %576, %v567
        %v578 = vpop.permute.xlu0 %577
        %581 = vset.pattern.permute.xlu0 0
        %582 = vperm.xlu0 %581, %v568
        %v583 = vpop.permute.xlu0 %582
        %586 = vset.pattern.permute.xlu0 0
        %587 = vperm.xlu0 %586, %v569
        %v588 = vpop.permute.xlu0 %587
        %v590 = vmul.f32 %v547, %v573
        %v591 = vmul.f32 %v549, %v578
        %v592 = vmul.f32 %v552, %v583
        %v593 = vmul.f32 %v554, %v588
        %v594 = vxor.u32 %v557, 2147483648
        %v595 = vxor.u32 %v559, 2147483648
        %v596 = vxor.u32 %v562, 2147483648
        %v597 = vxor.u32 %v564, 2147483648
        %v598 = vmul.f32 %v594, 1.442695
        %v599 = vpow.pop %v598
        %v600 = vmul.f32 %v595, 1.442695
        %v601 = vpow.pop %v600
        %v602 = vmul.f32 %v596, 1.442695
        %v603 = vpow.pop %v602
        %v604 = vmul.f32 %v597, 1.442695
        %v605 = vpow.pop %v604
        %v606 = vadd.f32 %v599, 1.0
        %v607 = vadd.f32 %v601, 1.0
        %v608 = vadd.f32 %v603, 1.0
        %v609 = vadd.f32 %v605, 1.0
        %v610 = vrcp.pop %v606
        %v611 = vmul.f32 %v606, %v610
        %v612 = vsub.f32 1.0, %v611
        %v613 = vmul.f32 %v610, %v612
        %v614 = vadd.f32 %v610, %v613
        %vm615 = vweird.f32 %v606
        %vm616 = vweird.f32 %v610
        %vm617 = vmor %vm615, %vm616
        %v618 = vsel %vm617, %v610, %v614
        %v619 = vand.u32 2147483647, %v606
        %vm620 = vcmp.eq.f32.partialorder %v619, 8.507059e+37
        %v621 = vand.u32 %v606, 2147483648
        %v622 = vor.u32 1.1754944e-38, %v621
        %v623 = vsel %vm620, %v622, %v618
        %v624 = vmul.f32 1.0, %v623
        %v625 = vrcp.pop %v607
        %v626 = vmul.f32 %v607, %v625
        %v627 = vsub.f32 1.0, %v626
        %v628 = vmul.f32 %v625, %v627
        %v629 = vadd.f32 %v625, %v628
        %vm630 = vweird.f32 %v607
        %vm631 = vweird.f32 %v625
        %vm632 = vmor %vm630, %vm631
        %v633 = vsel %vm632, %v625, %v629
        %v634 = vand.u32 2147483647, %v607
        %vm635 = vcmp.eq.f32.partialorder %v634, 8.507059e+37
        %v636 = vand.u32 %v607, 2147483648
        %v637 = vor.u32 1.1754944e-38, %v636
        %v638 = vsel %vm635, %v637, %v633
        %v639 = vmul.f32 1.0, %v638
        %v640 = vrcp.pop %v608
        %v641 = vmul.f32 %v608, %v640
        %v642 = vsub.f32 1.0, %v641
        %v643 = vmul.f32 %v640, %v642
        %v644 = vadd.f32 %v640, %v643
        %vm645 = vweird.f32 %v608
        %vm646 = vweird.f32 %v640
        %vm647 = vmor %vm645, %vm646
        %v648 = vsel %vm647, %v640, %v644
        %v649 = vand.u32 2147483647, %v608
        %vm650 = vcmp.eq.f32.partialorder %v649, 8.507059e+37
        %v651 = vand.u32 %v608, 2147483648
        %v652 = vor.u32 1.1754944e-38, %v651
        %v653 = vsel %vm650, %v652, %v648
        %v654 = vmul.f32 1.0, %v653
        %v655 = vrcp.pop %v609
        %v656 = vmul.f32 %v609, %v655
        %v657 = vsub.f32 1.0, %v656
        %v658 = vmul.f32 %v655, %v657
        %v659 = vadd.f32 %v655, %v658
        %vm660 = vweird.f32 %v609
        %vm661 = vweird.f32 %v655
        %vm662 = vmor %vm660, %vm661
        %v663 = vsel %vm662, %v655, %v659
        %v664 = vand.u32 2147483647, %v609
        %vm665 = vcmp.eq.f32.partialorder %v664, 8.507059e+37
        %v666 = vand.u32 %v609, 2147483648
        %v667 = vor.u32 1.1754944e-38, %v666
        %v668 = vsel %vm665, %v667, %v663
        %v669 = vmul.f32 1.0, %v668
        %v670 = vmul.f32 %v590, %v624
        %v671 = vmul.f32 %v591, %v639
        %v672 = vmul.f32 %v592, %v654
        %v673 = vmul.f32 %v593, %v669
        %v674 = vadd.f32 %v670, %v671
        %v675 = vadd.f32 %v674, %v672
        %v676 = vadd.f32 %v675, %v673
        %v677 = vrot.slane %v676, 4
        %v678 = vadd.f32 %v676, %v677
        %v679 = vrot.slane %v678, 2
        %v680 = vadd.f32 %v678, %v679
        %v681 = vrot.slane %v680, 1
        %v682 = vadd.f32 %v680, %v681
        %s683 = sld [smem:[#allocation2]]
        %v684 = vstv %s683
        %v685 = vadd.f32 %v682, %v684
        %v686 = vmax.f32 %v685, 0.0
        %687 = vst [vmem:[%s388] sm:$0x1] %v686
        %s688 = sand.u32 %s185, 1
        %s689 = scalar_lea.sflag [#allocation6], %s688
        %s690 = sand.u32 %s185, 1
        %s691 = scalar_lea.vmem [#allocation5], %s690
        // Predicated region
        $region127: #{tcn_forward.1} parent=117 // pred_check
          %p692 = pneg %p195
        $region128: #{tcn_forward.1} parent=117 // pred_check_branch
          %694 = sbr.rel (%p692) target = $region130
        $region129: #{tcn_forward.1} parent=117 // pred_region
          %696 = vsyncadd %s689, 0
          %s697 = sadd.s32 %s26, %s25
          %s698 = scalar_lea.hbm %s6, %s697
          %s700 = sshll.u32 %s691, 4
          %s701 = int_to_ptr.vmem [resolvable:$true] %s700
          %s702 = sshll.u32 %s698, 4
          %s703 = int_to_ptr.hbm [resolvable:$true] %s702
          %705 = dma.vmem_to_hbm [thread:$0]  %s701, 16, %s703, %s689
        $region130: #{tcn_forward.1} parent=117 // pred_fallthru
          _
      $region118: #{tcn_forward.1} parent=5 // pred_fallthru
        _
      %p706 = scmp.le.s32.totalorder 2, %s16
      // Predicated region
      $region131: #{tcn_forward.1} parent=5 // pred_check
        %p707 = pneg %p706
      $region132: #{tcn_forward.1} parent=5 // pred_check_branch
        %709 = sbr.rel (%p707) target = $region134
      $region133: #{tcn_forward.1} parent=5 // pred_region
        %s710 = ssub.s32 %s16, 2
        // Predicated region
        $region135: #{tcn_forward.1} parent=133 // pred_check
          %p711 = pneg %p201
        $region136: #{tcn_forward.1} parent=133 // pred_check_branch
          %713 = sbr.rel (%p711) target = $region138
        $region137: #{tcn_forward.1} parent=133 // pred_region
          %s714 = sand.u32 %s186, 1
          %s715 = scalar_lea.sflag [#allocation6], %s714
          %s716 = sand.u32 %s186, 1
          %s717 = scalar_lea.vmem [#allocation5], %s716
          %719 = dma.done %s715, 16
        $region138: #{tcn_forward.1} parent=133 // pred_fallthru
          _
      $region134: #{tcn_forward.1} parent=5 // pred_fallthru
        _
    $region6: #{tcn_forward.1} parent=1 // loop_footer
      %s20 = sadd.s32 1, %s16
    $region7: #{tcn_forward.1} parent=1 // loop_footer_branch
      %15 = sbr.rel target = $region3
    $region8: #{tcn_forward.1} parent=1 // loop_exit
      _
    %720 = vsyncpa [#allocation6], 1
    %s721 = scalar_lea.sflag [#allocation6], 1
    %722 = vsyncpa %s721, 1

</llo_original>
